<compile_context>
chip_gen: v7x
topology: tpu7x:2x2x1
jax: 0.10.0
libtpu: 0.0.40
codegen_flags: <defaults>
</compile_context>

<pallas_src>
import math
from functools import partial

import jax
import jax.numpy as jnp
from jax.experimental import pallas as pl
from jax.experimental.pallas import tpu as pltpu

_LANE = 128
_VMEM_LIMIT = 48 * 1024 * 1024   # fits v5e/v6e (128 MiB) and v7x (64 MiB)


def _round_up(x, m):
    return ((x + m - 1) // m) * m


def _pad2d(a, rows, cols, dtype):
    """Zero-pad a 2-D array to (rows, cols) and cast."""
    a = a.astype(dtype)
    r, c = a.shape
    if r == rows and c == cols:
        return a
    return jnp.zeros((rows, cols), dtype).at[:r, :c].set(a)


def _gelu_exact(x):
    # PyTorch nn.GELU() default (approximate='none'): erf-based GELU.
    return 0.5 * x * (1.0 + jax.lax.erf(x * (1.0 / math.sqrt(2.0))))


# ----------------------------------------------------------------------------
# dw=False path: Linear -> GELU -> Linear
# ----------------------------------------------------------------------------
def _mlp_linear_kernel(x_ref, w1_ref, b1_ref, w2_ref, b2_ref, o_ref):
    x = x_ref[...]                                                  # (tm, Cp) bf16
    h = jnp.dot(x, w1_ref[...], preferred_element_type=jnp.float32)
    h = h + b1_ref[...]
    h = _gelu_exact(h)                                              # f32 VPU/EUP
    out = jnp.dot(h.astype(jnp.bfloat16), w2_ref[...],
                  preferred_element_type=jnp.float32)
    out = out + b2_ref[...]
    o_ref[...] = out.astype(o_ref.dtype)


def mlp_linear(x, w1, b1, w2, b2, *, tile_m=256):
    # x: (B, N, D) channels-last; rows flattened to (M, D) and tiled over M.
    B, N, D = x.shape
    HID = w1.shape[1]
    out_dtype = x.dtype
    M = B * N

    Dp = _round_up(D, _LANE)
    HIDp = _round_up(HID, _LANE)
    if M < tile_m:
        tile_m = _round_up(M, 8)
    Mp = _round_up(M, tile_m)

    # Lane-dense padding (zeros) + bf16 MXU operands.
    xf = _pad2d(x.reshape(M, D), Mp, Dp, jnp.bfloat16)
    w1p = _pad2d(w1, Dp, HIDp, jnp.bfloat16)
    b1p = _pad2d(b1, 1, HIDp, jnp.float32)
    w2p = _pad2d(w2, HIDp, Dp, jnp.bfloat16)
    b2p = _pad2d(b2, 1, Dp, jnp.float32)

    out = pl.pallas_call(
        _mlp_linear_kernel,
        out_shape=jax.ShapeDtypeStruct((Mp, Dp), out_dtype),
        grid_spec=pltpu.PrefetchScalarGridSpec(
            num_scalar_prefetch=0,
            grid=(Mp // tile_m,),
            in_specs=[
                pl.BlockSpec((tile_m, Dp), lambda i: (i, 0)),
                pl.BlockSpec((Dp, HIDp), lambda i: (0, 0)),
                pl.BlockSpec((1, HIDp), lambda i: (0, 0)),
                pl.BlockSpec((HIDp, Dp), lambda i: (0, 0)),
                pl.BlockSpec((1, Dp), lambda i: (0, 0)),
            ],
            out_specs=pl.BlockSpec((tile_m, Dp), lambda i: (i, 0)),
        ),
        compiler_params=pltpu.CompilerParams(
            dimension_semantics=("parallel",),
            vmem_limit_bytes=_VMEM_LIMIT),
    )(xf, w1p, b1p, w2p, b2p)
    return out[:M, :D].reshape(B, N, D)


# ----------------------------------------------------------------------------
# dw=True path: 1x1 conv + GELU + BN, depthwise 3x3 + residual,
#               GELU + BN + 1x1 conv + BN    (fused; Bt images per grid step)
# ----------------------------------------------------------------------------
def _mlp_dw_kernel(H, W,
                   x_ref, w1_ref, b1_ref, s1_ref, t1_ref,
                   dwk_ref, dwb_ref, s2_ref, t2_ref,
                   w2_ref, b2_ref, s3_ref, t3_ref, o_ref):
    rows = x_ref.shape[0]          # Bt * H * W flattened pixels
    HIDp = w1_ref.shape[1]

    # fc1: 1x1 conv (matmul, bf16 -> f32 acc) + GELU + BN (inference affine)
    x = x_ref[...]                                                  # bf16
    h1 = jnp.dot(x, w1_ref[...], preferred_element_type=jnp.float32)
    h1 = _gelu_exact(h1 + b1_ref[...])
    h1 = h1 * s1_ref[...] + t1_ref[...]                             # (rows, HIDp) f32

    # Depthwise 3x3 SAME conv done entirely in values: for each tap (dh, dw)
    # the neighbour of flat pixel i is pixel i + dh*W + dw, obtained with a
    # sublane rotate (pltpu.roll, XLU) and masked at image/row borders.  The
    # masks also kill any wrap-around between the Bt images in the block.
    idx = jax.lax.broadcasted_iota(jnp.int32, (rows, 1), 0)
    hrow = (idx // W) % H
    wcol = idx % W

    dwk = dwk_ref[...]                                              # (9, HIDp) f32
    acc = jnp.zeros((rows, HIDp), jnp.float32)
    k = 0
    for dh in (-1, 0, 1):
        for dw_ in (-1, 0, 1):
            off = dh * W + dw_
            shifted = h1 if off == 0 else pltpu.roll(
                h1, shift=(-off) % rows, axis=0)
            valid = ((hrow >= -dh) & (hrow < H - dh) &
                     (wcol >= -dw_) & (wcol < W - dw_))
            acc = acc + jnp.where(valid, shifted, 0.0) * dwk[k:k + 1, :]
            k += 1

    # conv bias + residual
    h2 = acc + dwb_ref[...] + h1

    # fc2: GELU + BN + 1x1 conv + BN
    h2 = _gelu_exact(h2)
    h2 = h2 * s2_ref[...] + t2_ref[...]
    h3 = jnp.dot(h2.astype(jnp.bfloat16), w2_ref[...],
                 preferred_element_type=jnp.float32)
    h3 = h3 + b2_ref[...]
    h3 = h3 * s3_ref[...] + t3_ref[...]                             # (rows, Cp)

    o_ref[...] = h3.astype(o_ref.dtype)


def _pick_bt(B, N, target_rows=256, max_rows=1024):
    """Images per grid step: aim for >=256 matmul rows, divisor of B, and a
    row count compatible with the (8, 128) block rule."""
    bt = max(1, min(B, -(-target_rows // N)))
    while bt > 1 and bt * N > max_rows:
        bt -= 1
    while bt > 1 and (B % bt != 0 or (bt * N) % 8 != 0):
        bt -= 1
    if B % bt != 0 or ((bt * N) % 8 != 0 and bt != B):
        bt = B                      # full-array block: always a legal shape
    return bt


def mlp_dw(x, p, H, W):
    # x: (B, N, C), N = H*W row-major (h, w) -- equivalent to the PyTorch
    # permute(0,2,1).reshape(b,c,h,w) NCHW path.
    B, N, C = x.shape
    assert N == H * W
    HID = p["w1"].shape[1]
    out_dtype = x.dtype
    M = B * N

    Cp = _round_up(C, _LANE)
    HIDp = _round_up(HID, _LANE)
    Bt = _pick_bt(B, N)             # NOTE: on v7x keep B // Bt >= 2 if possible
    rows = Bt * N

    xf = _pad2d(x.reshape(M, C), M, Cp, jnp.bfloat16)
    w1p = _pad2d(p["w1"], Cp, HIDp, jnp.bfloat16)
    b1p = _pad2d(p["b1"], 1, HIDp, jnp.float32)
    s1p = _pad2d(p["bn1_scale"], 1, HIDp, jnp.float32)
    t1p = _pad2d(p["bn1_shift"], 1, HIDp, jnp.float32)
    dwkp = _pad2d(p["dwk"].reshape(9, HID), 9, HIDp, jnp.float32)
    dwbp = _pad2d(p["dwb"], 1, HIDp, jnp.float32)
    s2p = _pad2d(p["bn2_scale"], 1, HIDp, jnp.float32)
    t2p = _pad2d(p["bn2_shift"], 1, HIDp, jnp.float32)
    w2p = _pad2d(p["w2"], HIDp, Cp, jnp.bfloat16)
    b2p = _pad2d(p["b2"], 1, Cp, jnp.float32)
    s3p = _pad2d(p["bn3_scale"], 1, Cp, jnp.float32)
    t3p = _pad2d(p["bn3_shift"], 1, Cp, jnp.float32)

    kernel = partial(_mlp_dw_kernel, H, W)
    out = pl.pallas_call(
        kernel,
        out_shape=jax.ShapeDtypeStruct((M, Cp), out_dtype),
        grid_spec=pltpu.PrefetchScalarGridSpec(
            num_scalar_prefetch=0,
            grid=(B // Bt,),
            in_specs=[
                pl.BlockSpec((rows, Cp), lambda i: (i, 0)),
                pl.BlockSpec((Cp, HIDp), lambda i: (0, 0)),
                pl.BlockSpec((1, HIDp), lambda i: (0, 0)),
                pl.BlockSpec((1, HIDp), lambda i: (0, 0)),
                pl.BlockSpec((1, HIDp), lambda i: (0, 0)),
                pl.BlockSpec((9, HIDp), lambda i: (0, 0)),
                pl.BlockSpec((1, HIDp), lambda i: (0, 0)),
                pl.BlockSpec((1, HIDp), lambda i: (0, 0)),
                pl.BlockSpec((1, HIDp), lambda i: (0, 0)),
                pl.BlockSpec((HIDp, Cp), lambda i: (0, 0)),
                pl.BlockSpec((1, Cp), lambda i: (0, 0)),
                pl.BlockSpec((1, Cp), lambda i: (0, 0)),
                pl.BlockSpec((1, Cp), lambda i: (0, 0)),
            ],
            out_specs=pl.BlockSpec((rows, Cp), lambda i: (i, 0)),
        ),
        compiler_params=pltpu.CompilerParams(
            dimension_semantics=("parallel",),
            vmem_limit_bytes=_VMEM_LIMIT),
    )(xf, w1p, b1p, s1p, t1p, dwkp, dwbp, s2p, t2p, w2p, b2p, s3p, t3p)
    return out[:, :C].reshape(B, N, C)


# ----------------------------------------------------------------------------
# Pure-JAX f32 references (for a sanity check)
# ----------------------------------------------------------------------------
def ref_linear(x, w1, b1, w2, b2):
    h = _gelu_exact(x @ w1 + b1[0])
    return h @ w2 + b2[0]


def ref_dw(x, p, H, W):
    B, N, C = x.shape
    HID = p["w1"].shape[1]
    h1 = _gelu_exact(x @ p["w1"] + p["b1"][0])
    h1 = h1 * p["bn1_scale"][0] + p["bn1_shift"][0]
    h1_hw = h1.reshape(B, H, W, HID)
    dw = jax.lax.conv_general_dilated(
        h1_hw, p["dwk"].reshape(3, 3, 1, HID),
        window_strides=(1, 1), padding="SAME",
        dimension_numbers=("NHWC", "HWIO", "NHWC"),
        feature_group_count=HID)
    dw = dw + p["dwb"][0]
    h2 = _gelu_exact(dw + h1_hw)
    h2 = h2 * p["bn2_scale"][0] + p["bn2_shift"][0]
    h3 = h2.reshape(B, N, HID) @ p["w2"] + p["b2"][0]
    return h3 * p["bn3_scale"][0] + p["bn3_shift"][0]


# ----------------------------------------------------------------------------
# Deterministic parameter construction
# ----------------------------------------------------------------------------
def _bn_affine(kg, kb, km, kv, c, eps=1e-5):
    gamma = 1.0 + 0.1 * jax.random.normal(kg, (c,), jnp.float32)
    beta = 0.1 * jax.random.normal(kb, (c,), jnp.float32)
    mean = 0.1 * jax.random.normal(km, (c,), jnp.float32)
    var = 1.0 + jnp.abs(0.1 * jax.random.normal(kv, (c,), jnp.float32))
    scale = gamma / jnp.sqrt(var + eps)
    shift = beta - mean * scale
    return scale.reshape(1, c), shift.reshape(1, c)


def make_dw_params(key, dim, hidden):
    ks = jax.random.split(key, 18)
    p = {}
    p["w1"] = 0.1 * jax.random.normal(ks[0], (dim, hidden), jnp.float32)
    p["b1"] = 0.1 * jax.random.normal(ks[1], (1, hidden), jnp.float32)
    p["bn1_scale"], p["bn1_shift"] = _bn_affine(ks[2], ks[3], ks[4], ks[5], hidden)
    p["dwk"] = 0.1 * jax.random.normal(ks[6], (3, 3, hidden), jnp.float32)
    p["dwb"] = 0.1 * jax.random.normal(ks[7], (1, hidden), jnp.float32)
    p["bn2_scale"], p["bn2_shift"] = _bn_affine(ks[8], ks[9], ks[10], ks[11], hidden)
    p["w2"] = 0.1 * jax.random.normal(ks[12], (hidden, dim), jnp.float32)
    p["b2"] = 0.1 * jax.random.normal(ks[13], (1, dim), jnp.float32)
    p["bn3_scale"], p["bn3_shift"] = _bn_affine(ks[14], ks[15], ks[16], ks[17], dim)
    return p


if __name__ == "__main__":
    B, dim, mlp_ratio = 2, 32, 4
    hidden = dim * mlp_ratio          # 128
    H = W = 4
    N = H * W                         # 16

    key = jax.random.PRNGKey(0)
    kx, kl, kd = jax.random.split(key, 3)
    x = jax.random.normal(kx, (B, N, dim), jnp.float32)

    # dw=False params (nn.Linear weights, stored transposed: (in, out))
    kl1, kl2, kl3, kl4 = jax.random.split(kl, 4)
    lw1 = 0.1 * jax.random.normal(kl1, (dim, hidden), jnp.float32)
    lb1 = 0.1 * jax.random.normal(kl2, (1, hidden), jnp.float32)
    lw2 = 0.1 * jax.random.normal(kl3, (hidden, dim), jnp.float32)
    lb2 = 0.1 * jax.random.normal(kl4, (1, dim), jnp.float32)

    # dw=True params
    dw_params = make_dw_params(kd, dim, hidden)

    out_lin = jax.block_until_ready(mlp_linear(x, lw1, lb1, lw2, lb2))
    out_dw = jax.block_until_ready(mlp_dw(x, dw_params, H, W))

    # sanity check against pure-JAX f32 references (kernels use bf16 MXU
    # operands with f32 accumulation, hence the relaxed tolerance)
    ref_l = ref_linear(x, lw1, lb1, lw2, lb2)
    ref_d = ref_dw(x, dw_params, H, W)
    assert out_lin.shape == (B, N, dim) and out_dw.shape == (B, N, dim)
    assert jnp.max(jnp.abs(out_lin - ref_l)) < 5e-2
    assert jnp.max(jnp.abs(out_dw - ref_d)) < 5e-2

    print("KERNEL_OK")
</pallas_src>

<mosaic_0001>
module attributes {stable_mosaic.version = 11 : i64} {
  func.func @_mlp_linear_kernel(%arg0: i32, %arg1: memref<32x128xbf16, #tpu.memory_space<vmem>>, %arg2: memref<128x128xbf16, #tpu.memory_space<vmem>>, %arg3: memref<1x128xf32, #tpu.memory_space<vmem>>, %arg4: memref<128x128xbf16, #tpu.memory_space<vmem>>, %arg5: memref<1x128xf32, #tpu.memory_space<vmem>>, %arg6: memref<32x128xf32, #tpu.memory_space<vmem>>) attributes {dimension_semantics = [#tpu.dimension_semantics<parallel>], iteration_bounds = array<i64: 1>, scalar_prefetch = 0 : i64, scratch_operands = 0 : i64, tpu.core_type = #tpu.core_type<tc>, window_params = [{transform_indices = @transform_0, window_bounds = array<i64: 32, 128>}, {pipeline_mode = #tpu.pipeline_mode<synchronous>, transform_indices = @transform_1, window_bounds = array<i64: 128, 128>}, {pipeline_mode = #tpu.pipeline_mode<synchronous>, transform_indices = @transform_2, window_bounds = array<i64: 1, 128>}, {pipeline_mode = #tpu.pipeline_mode<synchronous>, transform_indices = @transform_3, window_bounds = array<i64: 128, 128>}, {pipeline_mode = #tpu.pipeline_mode<synchronous>, transform_indices = @transform_4, window_bounds = array<i64: 1, 128>}, {transform_indices = @transform_5, window_bounds = array<i64: 32, 128>}]} {
    %c0 = arith.constant 0 : index
    %c0_0 = arith.constant 0 : index
    %0 = vector.load %arg1[%c0, %c0_0] : memref<32x128xbf16, #tpu.memory_space<vmem>>, vector<32x128xbf16>
    %c0_1 = arith.constant 0 : index
    %c0_2 = arith.constant 0 : index
    %1 = vector.load %arg2[%c0_1, %c0_2] : memref<128x128xbf16, #tpu.memory_space<vmem>>, vector<128x128xbf16>
    %cst = arith.constant dense<0.000000e+00> : vector<32x128xf32>
    %2 = tpu.matmul %0, %1, %cst {dimension_numbers = #tpu.dot_dimension_numbers<[1], [0], [0], [1], [0, 0, 1, 1], [], []>} : vector<32x128xbf16>, vector<128x128xbf16>, vector<32x128xf32> -> vector<32x128xf32>
    %c0_3 = arith.constant 0 : index
    %c0_4 = arith.constant 0 : index
    %3 = vector.load %arg3[%c0_3, %c0_4] : memref<1x128xf32, #tpu.memory_space<vmem>>, vector<1x128xf32>
    %4 = vector.broadcast %3 : vector<1x128xf32> to vector<32x128xf32>
    %5 = arith.addf %2, %4 : vector<32x128xf32>
    %cst_5 = arith.constant 5.000000e-01 : f32
    %6 = vector.broadcast %cst_5 : f32 to vector<32x128xf32>
    %7 = arith.mulf %6, %5 : vector<32x128xf32>
    %cst_6 = arith.constant 0.707106769 : f32
    %8 = vector.broadcast %cst_6 : f32 to vector<32x128xf32>
    %9 = arith.mulf %5, %8 : vector<32x128xf32>
    %10 = math.erf %9 : vector<32x128xf32>
    %cst_7 = arith.constant 1.000000e+00 : f32
    %11 = vector.broadcast %cst_7 : f32 to vector<32x128xf32>
    %12 = arith.addf %11, %10 : vector<32x128xf32>
    %13 = arith.mulf %7, %12 : vector<32x128xf32>
    %14 = arith.truncf %13 : vector<32x128xf32> to vector<32x128xbf16>
    %c0_8 = arith.constant 0 : index
    %c0_9 = arith.constant 0 : index
    %15 = vector.load %arg4[%c0_8, %c0_9] : memref<128x128xbf16, #tpu.memory_space<vmem>>, vector<128x128xbf16>
    %cst_10 = arith.constant dense<0.000000e+00> : vector<32x128xf32>
    %16 = tpu.matmul %14, %15, %cst_10 {dimension_numbers = #tpu.dot_dimension_numbers<[1], [0], [0], [1], [0, 0, 1, 1], [], []>} : vector<32x128xbf16>, vector<128x128xbf16>, vector<32x128xf32> -> vector<32x128xf32>
    %c0_11 = arith.constant 0 : index
    %c0_12 = arith.constant 0 : index
    %17 = vector.load %arg5[%c0_11, %c0_12] : memref<1x128xf32, #tpu.memory_space<vmem>>, vector<1x128xf32>
    %18 = vector.broadcast %17 : vector<1x128xf32> to vector<32x128xf32>
    %19 = arith.addf %16, %18 : vector<32x128xf32>
    %c0_13 = arith.constant 0 : index
    %c0_14 = arith.constant 0 : index
    %20 = vector.load %arg6[%c0_13, %c0_14] : memref<32x128xf32, #tpu.memory_space<vmem>>, vector<32x128xf32>
    tpu.vector_store %arg6[%c0_13, %c0_14], %19 {strides = array<i32>} : memref<32x128xf32, #tpu.memory_space<vmem>>, vector<32x128xf32>,
    return
  }
  func.func @transform_0(%arg0: i32) -> (i32, i32) {
    %c0_i32 = arith.constant 0 : i32
    %c0_i32_0 = arith.constant 0 : i32
    return %arg0, %c0_i32 : i32, i32
  }
  func.func @transform_1(%arg0: i32) -> (i32, i32) {
    %c0_i32 = arith.constant 0 : i32
    %c0_i32_0 = arith.constant 0 : i32
    %c0_i32_1 = arith.constant 0 : i32
    return %c0_i32, %c0_i32_0 : i32, i32
  }
  func.func @transform_2(%arg0: i32) -> (i32, i32) {
    %c0_i32 = arith.constant 0 : i32
    %c0_i32_0 = arith.constant 0 : i32
    %c0_i32_1 = arith.constant 0 : i32
    return %c0_i32, %c0_i32_0 : i32, i32
  }
  func.func @transform_3(%arg0: i32) -> (i32, i32) {
    %c0_i32 = arith.constant 0 : i32
    %c0_i32_0 = arith.constant 0 : i32
    %c0_i32_1 = arith.constant 0 : i32
    return %c0_i32, %c0_i32_0 : i32, i32
  }
  func.func @transform_4(%arg0: i32) -> (i32, i32) {
    %c0_i32 = arith.constant 0 : i32
    %c0_i32_0 = arith.constant 0 : i32
    %c0_i32_1 = arith.constant 0 : i32
    return %c0_i32, %c0_i32_0 : i32, i32
  }
  func.func @transform_5(%arg0: i32) -> (i32, i32) {
    %c0_i32 = arith.constant 0 : i32
    %c0_i32_0 = arith.constant 0 : i32
    return %arg0, %c0_i32 : i32, i32
  }
}

</mosaic_0001>

<llo_original>
// kernel: tpu_custom_call.1
$region0: #{tpu_custom_call.1}
  #allocation0 [shape = 'u32[]', space=smem, size = 0x4, offset = 0x4, fixed_abs, tag = 'smem constant byte address 0x4 - core index']
  #allocation1 [shape = 'u32[144,128]{1,0:T(1,128)}', space=vmem, size = 0x12000, scoped, tag = 'internal scratch']
  %s0 = inlined_call_operand.hbm [shape: bf16[32,128], index: 0, kind: input, shape index: {}]
  %s1 = inlined_call_operand.hbm [shape: bf16[128,128], index: 1, kind: input, shape index: {}]
  %s2 = inlined_call_operand.vmem [shape: f32[1,128], index: 2, kind: input, shape index: {}]
  %s3 = inlined_call_operand.hbm [shape: bf16[128,128], index: 3, kind: input, shape index: {}]
  %s4 = inlined_call_operand.vmem [shape: f32[1,128], index: 4, kind: input, shape index: {}]
  %s5 = inlined_call_operand.hbm [shape: f32[32,128], index: 5, kind: output, shape index: {}]
  %s6 = sld [smem:[#allocation0]]
  $region42: #{tpu_custom_call.1} parent=0
    _
  %s8 = ssub.s32 1, %s6
  %s9 = scalar_select 0, %s8, %s6
  $region1: #{tpu_custom_call.1} parent=0
    #allocation2 [shape = 'u8[8192]{0}', space=vmem, size = 0x2000, scoped, tag = 'input window, operand 0, single buffered']
    #allocation3 [shape = 's32[1]{0}', space=sflag, size = 0x4, scoped, tag = 'scoped memory for tpu_custom_call.1']
    #allocation4 [shape = 's32[1]{0}', space=sflag, size = 0x4, scoped, tag = 'scoped memory for tpu_custom_call.1']
    #allocation5 [shape = 'u8[32768]{0}', space=vmem, size = 0x8000, scoped, tag = 'input window, operand 1, single buffered']
    #allocation6 [shape = 's32[1]{0}', space=sflag, size = 0x4, scoped, tag = 'scoped memory for tpu_custom_call.1']
    #allocation7 [shape = 'u8[32768]{0}', space=vmem, size = 0x8000, scoped, tag = 'input window, operand 3, single buffered']
    #allocation8 [shape = 'u8[16384]{0}', space=vmem, size = 0x4000, scoped, tag = 'output window, operand 0, single buffered']
    %10 = vsyncpa [#allocation3], 0
    %11 = vsyncpa [#allocation6], 0
    %12 = vsyncpa [#allocation4], 0
    // Predicated region
    $region2: #{tpu_custom_call.1} parent=1 // pred_check
      _
    $region3: #{tpu_custom_call.1} parent=1 // pred_check_branch
      %14 = sbr.rel (0) target = $region5
    $region4: #{tpu_custom_call.1} parent=1 // pred_region
      %s16 = ssub.s32 256, 256
      %17 = vsyncadd [#allocation3], %s16
      %s18 = sshll.u32 [#allocation2], 4
      %s19 = int_to_ptr.vmem [resolvable:$true] %s18
      %24 = dma.hbm_to_vmem [thread:$0]  %s0, 256, %s19, [#allocation3], 64, 64, 4
    $region5: #{tpu_custom_call.1} parent=1 // pred_fallthru
      _
    // Predicated region
    $region6: #{tpu_custom_call.1} parent=1 // pred_check
      _
    $region7: #{tpu_custom_call.1} parent=1 // pred_check_branch
      %26 = sbr.rel (0) target = $region9
    $region8: #{tpu_custom_call.1} parent=1 // pred_region
      %s28 = ssub.s32 1024, 1024
      %29 = vsyncadd [#allocation6], %s28
      %s30 = sshll.u32 [#allocation5], 4
      %s31 = int_to_ptr.vmem [resolvable:$true] %s30
      %36 = dma.hbm_to_vmem [thread:$0]  %s1, 1024, %s31, [#allocation6], 64, 64, 4
    $region9: #{tpu_custom_call.1} parent=1 // pred_fallthru
      _
    // Predicated region
    $region10: #{tpu_custom_call.1} parent=1 // pred_check
      _
    $region11: #{tpu_custom_call.1} parent=1 // pred_check_branch
      %38 = sbr.rel (0) target = $region13
    $region12: #{tpu_custom_call.1} parent=1 // pred_region
      _
    $region13: #{tpu_custom_call.1} parent=1 // pred_fallthru
      _
    // Predicated region
    $region14: #{tpu_custom_call.1} parent=1 // pred_check
      _
    $region15: #{tpu_custom_call.1} parent=1 // pred_check_branch
      %40 = sbr.rel (0) target = $region17
    $region16: #{tpu_custom_call.1} parent=1 // pred_region
      %s42 = ssub.s32 1024, 1024
      %43 = vsyncadd [#allocation6], %s42
      %s44 = sshll.u32 [#allocation7], 4
      %s45 = int_to_ptr.vmem [resolvable:$true] %s44
      %50 = dma.hbm_to_vmem [thread:$0]  %s3, 1024, %s45, [#allocation6], 64, 64, 4
    $region17: #{tpu_custom_call.1} parent=1 // pred_fallthru
      _
    // Predicated region
    $region18: #{tpu_custom_call.1} parent=1 // pred_check
      _
    $region19: #{tpu_custom_call.1} parent=1 // pred_check_branch
      %52 = sbr.rel (0) target = $region21
    $region20: #{tpu_custom_call.1} parent=1 // pred_region
      _
    $region21: #{tpu_custom_call.1} parent=1 // pred_fallthru
      _
    // Predicated region
    $region22: #{tpu_custom_call.1} parent=1 // pred_check
      _
    $region23: #{tpu_custom_call.1} parent=1 // pred_check_branch
      %54 = sbr.rel (0) target = $region25
    $region24: #{tpu_custom_call.1} parent=1 // pred_region
      %55 = dma.done [#allocation3], 256
    $region25: #{tpu_custom_call.1} parent=1 // pred_fallthru
      _
    // Predicated region
    $region26: #{tpu_custom_call.1} parent=1 // pred_check
      _
    $region27: #{tpu_custom_call.1} parent=1 // pred_check_branch
      %57 = sbr.rel (0) target = $region29
    $region28: #{tpu_custom_call.1} parent=1 // pred_region
      %58 = dma.done [#allocation6], 1024
    $region29: #{tpu_custom_call.1} parent=1 // pred_fallthru
      _
    // Predicated region
    $region30: #{tpu_custom_call.1} parent=1 // pred_check
      _
    $region31: #{tpu_custom_call.1} parent=1 // pred_check_branch
      %60 = sbr.rel (0) target = $region33
    $region32: #{tpu_custom_call.1} parent=1 // pred_region
      %61 = dma.done [#allocation6], 1024
    $region33: #{tpu_custom_call.1} parent=1 // pred_fallthru
      _
    %v63 = vld [vmem:[#allocation2] sm:$0xf]
    %v64 = vld [vmem:[#allocation2 + $0x4] sm:$0xf]
    %v65 = vld [vmem:[#allocation2 + $0x8] sm:$0xf]
    %v66 = vld [vmem:[#allocation2 + $0xc] sm:$0xf]
    %v67 = vld [vmem:[#allocation5] sm:$0xf]
    %v68 = vld [vmem:[#allocation5 + $0x4] sm:$0xf]
    %v69 = vld [vmem:[#allocation5 + $0x8] sm:$0xf]
    %v70 = vld [vmem:[#allocation5 + $0xc] sm:$0xf]
    %v71 = vld [vmem:[#allocation5 + $0x10] sm:$0xf]
    %v72 = vld [vmem:[#allocation5 + $0x14] sm:$0xf]
    %v73 = vld [vmem:[#allocation5 + $0x18] sm:$0xf]
    %v74 = vld [vmem:[#allocation5 + $0x1c] sm:$0xf]
    %v75 = vld [vmem:[#allocation5 + $0x20] sm:$0xf]
    %v76 = vld [vmem:[#allocation5 + $0x24] sm:$0xf]
    %v77 = vld [vmem:[#allocation5 + $0x28] sm:$0xf]
    %v78 = vld [vmem:[#allocation5 + $0x2c] sm:$0xf]
    %v79 = vld [vmem:[#allocation5 + $0x30] sm:$0xf]
    %v80 = vld [vmem:[#allocation5 + $0x34] sm:$0xf]
    %v81 = vld [vmem:[#allocation5 + $0x38] sm:$0xf]
    %v82 = vld [vmem:[#allocation5 + $0x3c] sm:$0xf]
    %v83 = vld [vmem:[%s2] sm:$0x1]
    %v85 = vlaneseq
    %v86 = vshrl.u32 %v85, 7
    %v87 = vsub.s32 0, %v86
    %v88 = vrot.slane %v83, %v87
    %v94 = vunpack.c.l.b16 %v63
    %v95 = vunpack.c.l.b16 %v64
    %v96 = vunpack.c.l.b16 %v65
    %v97 = vunpack.c.l.b16 %v66
    %v98 = vpack.c.b16 %v95, %v94
    %v99 = vpack.c.b16 %v97, %v96
    %v118 = vunpack.c.l.b16 %v67
    %v119 = vunpack.c.l.b16 %v68
    %v120 = vunpack.c.l.b16 %v69
    %v121 = vunpack.c.l.b16 %v70
    %v122 = vunpack.c.l.b16 %v71
    %v123 = vunpack.c.l.b16 %v72
    %v124 = vunpack.c.l.b16 %v73
    %v125 = vunpack.c.l.b16 %v74
    %v126 = vunpack.c.l.b16 %v75
    %v127 = vunpack.c.l.b16 %v76
    %v128 = vunpack.c.l.b16 %v77
    %v129 = vunpack.c.l.b16 %v78
    %v130 = vunpack.c.l.b16 %v79
    %v131 = vunpack.c.l.b16 %v80
    %v132 = vunpack.c.l.b16 %v81
    %v133 = vunpack.c.l.b16 %v82
    %v134 = vpack.c.b16 %v119, %v118
    %v135 = vpack.c.b16 %v121, %v120
    %v136 = vpack.c.b16 %v123, %v122
    %v137 = vpack.c.b16 %v125, %v124
    %v138 = vpack.c.b16 %v127, %v126
    %v139 = vpack.c.b16 %v129, %v128
    %v140 = vpack.c.b16 %v131, %v130
    %v141 = vpack.c.b16 %v133, %v132
    %150 = vmatprep.subr.bf16.mxu0 0
    %151 = vmatpush1.bf16.msra.mxu0 %v134
    %152 = vmatprep.subr.bf16.mxu0 0
    %153 = vmatpush1.bf16.msra.mxu0 %v135
    %154 = vmatprep.subr.bf16.mxu0 0
    %155 = vmatpush1.bf16.msra.mxu0 %v136
    %156 = vmatprep.subr.bf16.mxu0 0
    %157 = vmatpush1.bf16.msra.mxu0 %v137
    %158 = vmatprep.subr.bf16.mxu0 0
    %159 = vmatpush1.bf16.msra.mxu0 %v138
    %160 = vmatprep.subr.bf16.mxu0 0
    %161 = vmatpush1.bf16.msra.mxu0 %v139
    %162 = vmatprep.subr.bf16.mxu0 0
    %163 = vmatpush1.bf16.msra.mxu0 %v140
    %164 = vmatprep.subr.bf16.mxu0 0
    %165 = vmatpush1.bf16.msra.mxu0 %v141
    %166 = vmatprep.subr.bf16.mxu0 0
    %167 = vmatpush1.bf16.msra.mxu0 0
    %168 = vmatprep.subr.bf16.mxu0 0
    %169 = vmatpush1.bf16.msra.mxu0 0
    %170 = vmatprep.subr.bf16.mxu0 0
    %171 = vmatpush1.bf16.msra.mxu0 0
    %172 = vmatprep.subr.bf16.mxu0 0
    %173 = vmatpush1.bf16.msra.mxu0 0
    %174 = vmatprep.subr.bf16.mxu0 0
    %175 = vmatpush1.bf16.msra.mxu0 0
    %176 = vmatprep.subr.bf16.mxu0 0
    %177 = vmatpush1.bf16.msra.mxu0 0
    %178 = vmatprep.subr.bf16.mxu0 0
    %179 = vmatpush1.bf16.msra.mxu0 0
    %180 = vmatprep.subr.bf16.mxu0 0
    %181 = vmatpush1.bf16.msra.mxu0 0
    %182 = vmatprep.mubr.bf16.mxu0 0
    %183 = vmatmul.mubr.bf16.gmra.mrb[0].mxu0 %v98
    %v184 = vpop.f32.mrb[0].mxu0
    %v185 = vadd.f32 %v88, %v184
    %v186 = vpop.f32.mrb[0].mxu0
    %v187 = vpop.f32.mrb[0].mxu0
    %v188 = vadd.f32 %v88, %v187
    %v189 = vpop.f32.mrb[0].mxu0
    %190 = vmatprep.mubr.bf16.mxu0 0
    %191 = vmatmul.mubr.bf16.gmra.mrb[0].mxu0 %v99
    %v192 = vpop.f32.mrb[0].mxu0
    %v193 = vadd.f32 %v88, %v192
    %v194 = vpop.f32.mrb[0].mxu0
    %v195 = vpop.f32.mrb[0].mxu0
    %v196 = vadd.f32 %v88, %v195
    %v197 = vpop.f32.mrb[0].mxu0
    %198 = vdwg.mxu0
    %v199 = vmul.f32 %v185, 0.5
    %v200 = vmul.f32 %v188, 0.5
    %v201 = vmul.f32 %v193, 0.5
    %v202 = vmul.f32 %v196, 0.5
    %v203 = vmul.f32 %v185, 0.70710677
    %v204 = vmul.f32 %v188, 0.70710677
    %v205 = vmul.f32 %v193, 0.70710677
    %v206 = vmul.f32 %v196, 0.70710677
    %v207 = verf.f32.pop %v203
    %v208 = verf.f32.pop %v204
    %v209 = verf.f32.pop %v205
    %v210 = verf.f32.pop %v206
    %v211 = vadd.f32 %v207, 1.0
    %v212 = vadd.f32 %v208, 1.0
    %v213 = vadd.f32 %v209, 1.0
    %v214 = vadd.f32 %v210, 1.0
    %v215 = vmul.f32 %v199, %v211
    %v216 = vmul.f32 %v200, %v212
    %v217 = vmul.f32 %v201, %v213
    %v218 = vmul.f32 %v202, %v214
    %v219 = vpack.c.bf16 %v216, %v215
    %v220 = vpack.c.bf16 %v218, %v217
    %v221 = vld [vmem:[#allocation7] sm:$0xf]
    %v222 = vld [vmem:[#allocation7 + $0x4] sm:$0xf]
    %v223 = vld [vmem:[#allocation7 + $0x8] sm:$0xf]
    %v224 = vld [vmem:[#allocation7 + $0xc] sm:$0xf]
    %v225 = vld [vmem:[#allocation7 + $0x10] sm:$0xf]
    %v226 = vld [vmem:[#allocation7 + $0x14] sm:$0xf]
    %v227 = vld [vmem:[#allocation7 + $0x18] sm:$0xf]
    %v228 = vld [vmem:[#allocation7 + $0x1c] sm:$0xf]
    %v229 = vld [vmem:[#allocation7 + $0x20] sm:$0xf]
    %v230 = vld [vmem:[#allocation7 + $0x24] sm:$0xf]
    %v231 = vld [vmem:[#allocation7 + $0x28] sm:$0xf]
    %v232 = vld [vmem:[#allocation7 + $0x2c] sm:$0xf]
    %v233 = vld [vmem:[#allocation7 + $0x30] sm:$0xf]
    %v234 = vld [vmem:[#allocation7 + $0x34] sm:$0xf]
    %v235 = vld [vmem:[#allocation7 + $0x38] sm:$0xf]
    %v236 = vld [vmem:[#allocation7 + $0x3c] sm:$0xf]
    %v237 = vld [vmem:[%s4] sm:$0x1]
    %v239 = vlaneseq
    %v240 = vshrl.u32 %v239, 7
    %v241 = vsub.s32 0, %v240
    %v242 = vrot.slane %v237, %v241
    %v260 = vunpack.c.l.b16 %v221
    %v261 = vunpack.c.l.b16 %v222
    %v262 = vunpack.c.l.b16 %v223
    %v263 = vunpack.c.l.b16 %v224
    %v264 = vunpack.c.l.b16 %v225
    %v265 = vunpack.c.l.b16 %v226
    %v266 = vunpack.c.l.b16 %v227
    %v267 = vunpack.c.l.b16 %v228
    %v268 = vunpack.c.l.b16 %v229
    %v269 = vunpack.c.l.b16 %v230
    %v270 = vunpack.c.l.b16 %v231
    %v271 = vunpack.c.l.b16 %v232
    %v272 = vunpack.c.l.b16 %v233
    %v273 = vunpack.c.l.b16 %v234
    %v274 = vunpack.c.l.b16 %v235
    %v275 = vunpack.c.l.b16 %v236
    %v276 = vpack.c.b16 %v261, %v260
    %v277 = vpack.c.b16 %v263, %v262
    %v278 = vpack.c.b16 %v265, %v264
    %v279 = vpack.c.b16 %v267, %v266
    %v280 = vpack.c.b16 %v269, %v268
    %v281 = vpack.c.b16 %v271, %v270
    %v282 = vpack.c.b16 %v273, %v272
    %v283 = vpack.c.b16 %v275, %v274
    %292 = vmatprep.subr.bf16.mxu0 0
    %293 = vmatpush1.bf16.msra.mxu0 %v276
    %294 = vmatprep.subr.bf16.mxu0 0
    %295 = vmatpush1.bf16.msra.mxu0 %v277
    %296 = vmatprep.subr.bf16.mxu0 0
    %297 = vmatpush1.bf16.msra.mxu0 %v278
    %298 = vmatprep.subr.bf16.mxu0 0
    %299 = vmatpush1.bf16.msra.mxu0 %v279
    %300 = vmatprep.subr.bf16.mxu0 0
    %301 = vmatpush1.bf16.msra.mxu0 %v280
    %302 = vmatprep.subr.bf16.mxu0 0
    %303 = vmatpush1.bf16.msra.mxu0 %v281
    %304 = vmatprep.subr.bf16.mxu0 0
    %305 = vmatpush1.bf16.msra.mxu0 %v282
    %306 = vmatprep.subr.bf16.mxu0 0
    %307 = vmatpush1.bf16.msra.mxu0 %v283
    %308 = vmatprep.subr.bf16.mxu0 0
    %309 = vmatpush1.bf16.msra.mxu0 0
    %310 = vmatprep.subr.bf16.mxu0 0
    %311 = vmatpush1.bf16.msra.mxu0 0
    %312 = vmatprep.subr.bf16.mxu0 0
    %313 = vmatpush1.bf16.msra.mxu0 0
    %314 = vmatprep.subr.bf16.mxu0 0
    %315 = vmatpush1.bf16.msra.mxu0 0
    %316 = vmatprep.subr.bf16.mxu0 0
    %317 = vmatpush1.bf16.msra.mxu0 0
    %318 = vmatprep.subr.bf16.mxu0 0
    %319 = vmatpush1.bf16.msra.mxu0 0
    %320 = vmatprep.subr.bf16.mxu0 0
    %321 = vmatpush1.bf16.msra.mxu0 0
    %322 = vmatprep.subr.bf16.mxu0 0
    %323 = vmatpush1.bf16.msra.mxu0 0
    %324 = vmatprep.mubr.bf16.mxu0 0
    %325 = vmatmul.mubr.bf16.gmra.mrb[0].mxu0 %v219
    %v326 = vpop.f32.mrb[0].mxu0
    %v327 = vadd.f32 %v242, %v326
    %v328 = vpop.f32.mrb[0].mxu0
    %v329 = vpop.f32.mrb[0].mxu0
    %v330 = vadd.f32 %v242, %v329
    %v331 = vpop.f32.mrb[0].mxu0
    %332 = vmatprep.mubr.bf16.mxu0 0
    %333 = vmatmul.mubr.bf16.gmra.mrb[0].mxu0 %v220
    %v334 = vpop.f32.mrb[0].mxu0
    %v335 = vadd.f32 %v242, %v334
    %v336 = vpop.f32.mrb[0].mxu0
    %v337 = vpop.f32.mrb[0].mxu0
    %v338 = vadd.f32 %v242, %v337
    %v339 = vpop.f32.mrb[0].mxu0
    %340 = vdwg.mxu0
    %341 = vst [vmem:[#allocation8] sm:$0xff] %v327
    %342 = vst [vmem:[#allocation8 + $0x8] sm:$0xff] %v330
    %343 = vst [vmem:[#allocation8 + $0x10] sm:$0xff] %v335
    %344 = vst [vmem:[#allocation8 + $0x18] sm:$0xff] %v338
    // Predicated region
    $region34: #{tpu_custom_call.1} parent=1 // pred_check
      _
    $region35: #{tpu_custom_call.1} parent=1 // pred_check_branch
      %346 = sbr.rel (0) target = $region37
    $region36: #{tpu_custom_call.1} parent=1 // pred_region
      %s348 = ssub.s32 512, 512
      %349 = vsyncadd [#allocation4], %s348
      %s350 = sshll.u32 [#allocation8], 4
      %s351 = int_to_ptr.vmem [resolvable:$true] %s350
      %356 = dma.vmem_to_hbm [thread:$0]  %s351, 512, %s5, [#allocation4], 128, 128, 8
    $region37: #{tpu_custom_call.1} parent=1 // pred_fallthru
      _
    // Predicated region
    $region38: #{tpu_custom_call.1} parent=1 // pred_check
      _
    $region39: #{tpu_custom_call.1} parent=1 // pred_check_branch
      %358 = sbr.rel (0) target = $region41
    $region40: #{tpu_custom_call.1} parent=1 // pred_region
      %359 = dma.done [#allocation4], 512
    $region41: #{tpu_custom_call.1} parent=1 // pred_fallthru
      _
    %360 = vsyncpa [#allocation3], 1
    %361 = vsyncpa [#allocation6], 1
    %362 = vsyncpa [#allocation4], 1

</llo_original>
